<compile_context>
chip_gen: v7x
topology: tpu7x:2x2x1
jax: 0.10.0
libtpu: 0.0.40
codegen_flags: <defaults>
</compile_context>

<pallas_src>
import math

import jax
import jax.numpy as jnp
from jax.experimental import pallas as pl
from jax.experimental.pallas import tpu as pltpu

_LANE = 128
_SUBLANE = 8
_LEAKY_SLOPE = 0.01


def _actor_kernel(x_ref, w1_ref, b1_ref, w2_ref, b2_ref, w3_ref, b3_ref, out_ref):
    """Fused MLP forward for one (TILE_B, state_dim) batch tile."""
    x = x_ref[...]

    # Layer 1: Linear + LeakyReLU(0.01)
    h1 = jnp.dot(x, w1_ref[...], preferred_element_type=jnp.float32) + b1_ref[...]
    h1 = jnp.maximum(h1, _LEAKY_SLOPE * h1)

    # Layer 2: Linear + LeakyReLU(0.01)
    h2 = jnp.dot(h1, w2_ref[...], preferred_element_type=jnp.float32) + b2_ref[...]
    h2 = jnp.maximum(h2, _LEAKY_SLOPE * h2)

    # Output layer: Linear + tanh (out-features padded to a lane-dense 128 by the wrapper)
    h3 = jnp.dot(h2, w3_ref[...], preferred_element_type=jnp.float32) + b3_ref[...]
    out_ref[...] = jnp.tanh(h3).astype(out_ref.dtype)


def _round_up(n, m):
    return ((n + m - 1) // m) * m


def actor_forward(x, params, *, tile_b=128):
    """Batched forward: grid over the batch axis, weights resident across grid steps."""
    w1, b1, w2, b2, w3, b3 = params
    B, state_dim = x.shape
    action_dim = w3.shape[1]

    # Lane-dense output: zero-pad final-layer out-features to a multiple of 128.
    out_pad = _round_up(action_dim, _LANE)
    if out_pad != action_dim:
        w3p = jnp.pad(w3, ((0, 0), (0, out_pad - action_dim)))
        b3p = jnp.pad(b3, ((0, 0), (0, out_pad - action_dim)))
    else:
        w3p, b3p = w3, b3

    # Batch tile: multiple of the sublane width, padded batch a multiple of the tile.
    tb = min(tile_b, _round_up(B, _SUBLANE))
    tb = _round_up(tb, _SUBLANE)
    b_pad = _round_up(B, tb)
    xp = jnp.pad(x, ((0, b_pad - B), (0, 0))) if b_pad != B else x
    grid = (b_pad // tb,)

    # Constant index_map -> param block re-used (no re-DMA) every grid step.
    resident = lambda a: pl.BlockSpec(a.shape, lambda i: (0, 0))

    out_padded = pl.pallas_call(
        _actor_kernel,
        out_shape=jax.ShapeDtypeStruct((b_pad, out_pad), jnp.float32),
        grid=grid,
        in_specs=[
            pl.BlockSpec((tb, state_dim), lambda i: (i, 0)),  # x: tiled over batch
            resident(w1), resident(b1),
            resident(w2), resident(b2),
            resident(w3p), resident(b3p),
        ],
        out_specs=pl.BlockSpec((tb, out_pad), lambda i: (i, 0)),
        compiler_params=pltpu.CompilerParams(
            dimension_semantics=("parallel",)),  # v7x: 2 TCs split the batch grid
    )(xp, w1, b1, w2, b2, w3p, b3p)

    return out_padded[:B, :action_dim]


def actor_forward_ref(x, params):
    """Pure-JAX reference (same math) for correctness checking."""
    w1, b1, w2, b2, w3, b3 = params
    h1 = x @ w1 + b1
    h1 = jnp.where(h1 >= 0, h1, _LEAKY_SLOPE * h1)
    h2 = h1 @ w2 + b2
    h2 = jnp.where(h2 >= 0, h2, _LEAKY_SLOPE * h2)
    return jnp.tanh(h2 @ w3 + b3)


def init_actor_params(key, state_dim, num_units_1, num_units_2, action_dim):
    """Mirror PyTorch: default nn.Linear init U(-1/sqrt(fan_in), 1/sqrt(fan_in)),
    then weights scaled by calculate_gain('leaky_relu') / calculate_gain('tanh')
    as in Actor.reset_parameters()."""
    gain_lrelu = math.sqrt(2.0 / (1.0 + 0.01 ** 2))  # calculate_gain('leaky_relu')
    gain_tanh = 5.0 / 3.0                            # calculate_gain('tanh')

    def linear(key, fan_in, fan_out, gain):
        kw, kb = jax.random.split(key)
        bound = 1.0 / math.sqrt(fan_in)
        # stored as (in, out) so the kernel does x @ W
        w = jax.random.uniform(kw, (fan_in, fan_out), jnp.float32, -bound, bound) * gain
        b = jax.random.uniform(kb, (1, fan_out), jnp.float32, -bound, bound)
        return w, b

    k1, k2, k3 = jax.random.split(key, 3)
    w1, b1 = linear(k1, state_dim, num_units_1, gain_lrelu)
    w2, b2 = linear(k2, num_units_1, num_units_2, gain_lrelu)
    w3, b3 = linear(k3, num_units_2, action_dim, gain_tanh)
    return (w1, b1, w2, b2, w3, b3)


if __name__ == "__main__":
    state_dim = 16
    num_units_1 = 32
    num_units_2 = 32
    action_dim = 8

    key = jax.random.PRNGKey(0)
    k_x1, k_x2, k_p = jax.random.split(key, 3)
    params = init_actor_params(k_p, state_dim, num_units_1, num_units_2, action_dim)

    # Small-batch case (module-consistent shapes; exercises batch padding).
    x_small = jax.random.normal(k_x1, (2, state_dim), dtype=jnp.float32)
    policy_small = actor_forward(x_small, params)
    jax.block_until_ready(policy_small)
    assert policy_small.shape == (2, action_dim)
    assert bool(jnp.allclose(policy_small, actor_forward_ref(x_small, params),
                             atol=1e-5, rtol=1e-5))
    assert bool(jnp.all(jnp.abs(policy_small) <= 1.0))

    # Batched case (exercises the multi-step grid with VMEM-resident weights).
    x_big = jax.random.normal(k_x2, (256, state_dim), dtype=jnp.float32)
    policy_big = actor_forward(x_big, params)
    jax.block_until_ready(policy_big)
    assert policy_big.shape == (256, action_dim)
    assert bool(jnp.allclose(policy_big, actor_forward_ref(x_big, params),
                             atol=1e-5, rtol=1e-5))

    print("KERNEL_OK")
</pallas_src>

<mosaic_0001>
module attributes {stable_mosaic.version = 11 : i64} {
  func.func @_actor_kernel(%arg0: i32, %arg1: memref<8x16xf32, #tpu.memory_space<vmem>>, %arg2: memref<16x32xf32, #tpu.memory_space<vmem>>, %arg3: memref<1x32xf32, #tpu.memory_space<vmem>>, %arg4: memref<32x32xf32, #tpu.memory_space<vmem>>, %arg5: memref<1x32xf32, #tpu.memory_space<vmem>>, %arg6: memref<32x128xf32, #tpu.memory_space<vmem>>, %arg7: memref<1x128xf32, #tpu.memory_space<vmem>>, %arg8: memref<8x128xf32, #tpu.memory_space<vmem>>) attributes {dimension_semantics = [#tpu.dimension_semantics<parallel>], iteration_bounds = array<i64: 1>, scalar_prefetch = 0 : i64, scratch_operands = 0 : i64, tpu.core_type = #tpu.core_type<tc>, window_params = [{transform_indices = @transform_0, window_bounds = array<i64: 8, 16>}, {pipeline_mode = #tpu.pipeline_mode<synchronous>, transform_indices = @transform_1, window_bounds = array<i64: 16, 32>}, {pipeline_mode = #tpu.pipeline_mode<synchronous>, transform_indices = @transform_2, window_bounds = array<i64: 1, 32>}, {pipeline_mode = #tpu.pipeline_mode<synchronous>, transform_indices = @transform_3, window_bounds = array<i64: 32, 32>}, {pipeline_mode = #tpu.pipeline_mode<synchronous>, transform_indices = @transform_4, window_bounds = array<i64: 1, 32>}, {pipeline_mode = #tpu.pipeline_mode<synchronous>, transform_indices = @transform_5, window_bounds = array<i64: 32, 128>}, {pipeline_mode = #tpu.pipeline_mode<synchronous>, transform_indices = @transform_6, window_bounds = array<i64: 1, 128>}, {transform_indices = @transform_7, window_bounds = array<i64: 8, 128>}]} {
    %c0 = arith.constant 0 : index
    %c0_0 = arith.constant 0 : index
    %0 = vector.load %arg1[%c0, %c0_0] : memref<8x16xf32, #tpu.memory_space<vmem>>, vector<8x16xf32>
    %c0_1 = arith.constant 0 : index
    %c0_2 = arith.constant 0 : index
    %1 = vector.load %arg2[%c0_1, %c0_2] : memref<16x32xf32, #tpu.memory_space<vmem>>, vector<16x32xf32>
    %cst = arith.constant dense<0.000000e+00> : vector<8x32xf32>
    %2 = tpu.matmul %0, %1, %cst {dimension_numbers = #tpu.dot_dimension_numbers<[1], [0], [0], [1], [0, 0, 1, 1], [], []>} : vector<8x16xf32>, vector<16x32xf32>, vector<8x32xf32> -> vector<8x32xf32>
    %c0_3 = arith.constant 0 : index
    %c0_4 = arith.constant 0 : index
    %3 = vector.load %arg3[%c0_3, %c0_4] : memref<1x32xf32, #tpu.memory_space<vmem>>, vector<1x32xf32>
    %4 = vector.broadcast %3 : vector<1x32xf32> to vector<8x32xf32>
    %5 = arith.addf %2, %4 : vector<8x32xf32>
    %cst_5 = arith.constant 0.00999999977 : f32
    %6 = vector.broadcast %cst_5 : f32 to vector<8x32xf32>
    %7 = arith.mulf %6, %5 : vector<8x32xf32>
    %8 = arith.maximumf %5, %7 : vector<8x32xf32>
    %c0_6 = arith.constant 0 : index
    %c0_7 = arith.constant 0 : index
    %9 = vector.load %arg4[%c0_6, %c0_7] : memref<32x32xf32, #tpu.memory_space<vmem>>, vector<32x32xf32>
    %cst_8 = arith.constant dense<0.000000e+00> : vector<8x32xf32>
    %10 = tpu.matmul %8, %9, %cst_8 {dimension_numbers = #tpu.dot_dimension_numbers<[1], [0], [0], [1], [0, 0, 1, 1], [], []>} : vector<8x32xf32>, vector<32x32xf32>, vector<8x32xf32> -> vector<8x32xf32>
    %c0_9 = arith.constant 0 : index
    %c0_10 = arith.constant 0 : index
    %11 = vector.load %arg5[%c0_9, %c0_10] : memref<1x32xf32, #tpu.memory_space<vmem>>, vector<1x32xf32>
    %12 = vector.broadcast %11 : vector<1x32xf32> to vector<8x32xf32>
    %13 = arith.addf %10, %12 : vector<8x32xf32>
    %cst_11 = arith.constant 0.00999999977 : f32
    %14 = vector.broadcast %cst_11 : f32 to vector<8x32xf32>
    %15 = arith.mulf %14, %13 : vector<8x32xf32>
    %16 = arith.maximumf %13, %15 : vector<8x32xf32>
    %c0_12 = arith.constant 0 : index
    %c0_13 = arith.constant 0 : index
    %17 = vector.load %arg6[%c0_12, %c0_13] : memref<32x128xf32, #tpu.memory_space<vmem>>, vector<32x128xf32>
    %cst_14 = arith.constant dense<0.000000e+00> : vector<8x128xf32>
    %18 = tpu.matmul %16, %17, %cst_14 {dimension_numbers = #tpu.dot_dimension_numbers<[1], [0], [0], [1], [0, 0, 1, 1], [], []>} : vector<8x32xf32>, vector<32x128xf32>, vector<8x128xf32> -> vector<8x128xf32>
    %c0_15 = arith.constant 0 : index
    %c0_16 = arith.constant 0 : index
    %19 = vector.load %arg7[%c0_15, %c0_16] : memref<1x128xf32, #tpu.memory_space<vmem>>, vector<1x128xf32>
    %20 = vector.broadcast %19 : vector<1x128xf32> to vector<8x128xf32>
    %21 = arith.addf %18, %20 : vector<8x128xf32>
    %22 = math.tanh %21 : vector<8x128xf32>
    %c0_17 = arith.constant 0 : index
    %c0_18 = arith.constant 0 : index
    %23 = vector.load %arg8[%c0_17, %c0_18] : memref<8x128xf32, #tpu.memory_space<vmem>>, vector<8x128xf32>
    tpu.vector_store %arg8[%c0_17, %c0_18], %22 {strides = array<i32>} : memref<8x128xf32, #tpu.memory_space<vmem>>, vector<8x128xf32>,
    return
  }
  func.func @transform_0(%arg0: i32) -> (i32, i32) {
    %c0_i32 = arith.constant 0 : i32
    %c0_i32_0 = arith.constant 0 : i32
    return %arg0, %c0_i32 : i32, i32
  }
  func.func @transform_1(%arg0: i32) -> (i32, i32) {
    %c0_i32 = arith.constant 0 : i32
    %c0_i32_0 = arith.constant 0 : i32
    %c0_i32_1 = arith.constant 0 : i32
    return %c0_i32, %c0_i32_0 : i32, i32
  }
  func.func @transform_2(%arg0: i32) -> (i32, i32) {
    %c0_i32 = arith.constant 0 : i32
    %c0_i32_0 = arith.constant 0 : i32
    %c0_i32_1 = arith.constant 0 : i32
    return %c0_i32, %c0_i32_0 : i32, i32
  }
  func.func @transform_3(%arg0: i32) -> (i32, i32) {
    %c0_i32 = arith.constant 0 : i32
    %c0_i32_0 = arith.constant 0 : i32
    %c0_i32_1 = arith.constant 0 : i32
    return %c0_i32, %c0_i32_0 : i32, i32
  }
  func.func @transform_4(%arg0: i32) -> (i32, i32) {
    %c0_i32 = arith.constant 0 : i32
    %c0_i32_0 = arith.constant 0 : i32
    %c0_i32_1 = arith.constant 0 : i32
    return %c0_i32, %c0_i32_0 : i32, i32
  }
  func.func @transform_5(%arg0: i32) -> (i32, i32) {
    %c0_i32 = arith.constant 0 : i32
    %c0_i32_0 = arith.constant 0 : i32
    %c0_i32_1 = arith.constant 0 : i32
    return %c0_i32, %c0_i32_0 : i32, i32
  }
  func.func @transform_6(%arg0: i32) -> (i32, i32) {
    %c0_i32 = arith.constant 0 : i32
    %c0_i32_0 = arith.constant 0 : i32
    %c0_i32_1 = arith.constant 0 : i32
    return %c0_i32, %c0_i32_0 : i32, i32
  }
  func.func @transform_7(%arg0: i32) -> (i32, i32) {
    %c0_i32 = arith.constant 0 : i32
    %c0_i32_0 = arith.constant 0 : i32
    return %arg0, %c0_i32 : i32, i32
  }
}

</mosaic_0001>

<llo_original>
// kernel: tpu_custom_call.1
$region0: #{tpu_custom_call.1}
  #allocation0 [shape = 'u32[]', space=smem, size = 0x4, offset = 0x4, fixed_abs, tag = 'smem constant byte address 0x4 - core index']
  #allocation1 [shape = 'u32[144,128]{1,0:T(1,128)}', space=vmem, size = 0x12000, scoped, tag = 'internal scratch']
  %s0 = inlined_call_operand.hbm [shape: f32[8,16], index: 0, kind: input, shape index: {}]
  %s1 = inlined_call_operand.hbm [shape: f32[16,32], index: 1, kind: input, shape index: {}]
  %s2 = inlined_call_operand.vmem [shape: f32[1,32], index: 2, kind: input, shape index: {}]
  %s3 = inlined_call_operand.hbm [shape: f32[32,32], index: 3, kind: input, shape index: {}]
  %s4 = inlined_call_operand.vmem [shape: f32[1,32], index: 4, kind: input, shape index: {}]
  %s5 = inlined_call_operand.hbm [shape: f32[32,128], index: 5, kind: input, shape index: {}]
  %s6 = inlined_call_operand.vmem [shape: f32[1,128], index: 6, kind: input, shape index: {}]
  %s7 = inlined_call_operand.hbm [shape: f32[8,128], index: 7, kind: output, shape index: {}]
  %s8 = sld [smem:[#allocation0]]
  $region54: #{tpu_custom_call.1} parent=0
    _
  %s10 = ssub.s32 1, %s8
  %s11 = scalar_select 0, %s10, %s8
  $region1: #{tpu_custom_call.1} parent=0
    #allocation2 [shape = 'u8[4096]{0}', space=vmem, size = 0x1000, scoped, tag = 'input window, operand 0, single buffered']
    #allocation3 [shape = 's32[1]{0}', space=sflag, size = 0x4, scoped, tag = 'scoped memory for tpu_custom_call.1']
    #allocation4 [shape = 's32[1]{0}', space=sflag, size = 0x4, scoped, tag = 'scoped memory for tpu_custom_call.1']
    #allocation5 [shape = 'u8[8192]{0}', space=vmem, size = 0x2000, scoped, tag = 'input window, operand 1, single buffered']
    #allocation6 [shape = 's32[1]{0}', space=sflag, size = 0x4, scoped, tag = 'scoped memory for tpu_custom_call.1']
    #allocation7 [shape = 'u8[16384]{0}', space=vmem, size = 0x4000, scoped, tag = 'input window, operand 3, single buffered']
    #allocation8 [shape = 'u8[16384]{0}', space=vmem, size = 0x4000, scoped, tag = 'input window, operand 5, single buffered']
    #allocation9 [shape = 's32[1]{0}', space=sflag, size = 0x4, scoped, tag = 'scoped memory for tpu_custom_call.1']
    #allocation10 [shape = 'u8[4096]{0}', space=vmem, size = 0x1000, scoped, tag = 'output window, operand 0, single buffered']
    %12 = vsyncpa [#allocation3], 0
    %13 = vsyncpa [#allocation6], 0
    %14 = vsyncpa [#allocation9], 0
    %15 = vsyncpa [#allocation4], 0
    // Predicated region
    $region2: #{tpu_custom_call.1} parent=1 // pred_check
      _
    $region3: #{tpu_custom_call.1} parent=1 // pred_check_branch
      %17 = sbr.rel (0) target = $region5
    $region4: #{tpu_custom_call.1} parent=1 // pred_region
      %s19 = ssub.s32 128, 128
      %20 = vsyncadd [#allocation3], %s19
      %s22 = sshll.u32 [#allocation2], 4
      %s23 = int_to_ptr.vmem [resolvable:$true] %s22
      %25 = dma.hbm_to_vmem [thread:$0]  %s0, 128, %s23, [#allocation3]
    $region5: #{tpu_custom_call.1} parent=1 // pred_fallthru
      _
    // Predicated region
    $region6: #{tpu_custom_call.1} parent=1 // pred_check
      _
    $region7: #{tpu_custom_call.1} parent=1 // pred_check_branch
      %27 = sbr.rel (0) target = $region9
    $region8: #{tpu_custom_call.1} parent=1 // pred_region
      %s29 = ssub.s32 256, 256
      %30 = vsyncadd [#allocation6], %s29
      %s31 = sshll.u32 [#allocation5], 4
      %s32 = int_to_ptr.vmem [resolvable:$true] %s31
      %37 = dma.hbm_to_vmem [thread:$0]  %s1, 256, %s32, [#allocation6], 128, 128, 8
    $region9: #{tpu_custom_call.1} parent=1 // pred_fallthru
      _
    // Predicated region
    $region10: #{tpu_custom_call.1} parent=1 // pred_check
      _
    $region11: #{tpu_custom_call.1} parent=1 // pred_check_branch
      %39 = sbr.rel (0) target = $region13
    $region12: #{tpu_custom_call.1} parent=1 // pred_region
      _
    $region13: #{tpu_custom_call.1} parent=1 // pred_fallthru
      _
    // Predicated region
    $region14: #{tpu_custom_call.1} parent=1 // pred_check
      _
    $region15: #{tpu_custom_call.1} parent=1 // pred_check_branch
      %41 = sbr.rel (0) target = $region17
    $region16: #{tpu_custom_call.1} parent=1 // pred_region
      %s43 = ssub.s32 512, 512
      %44 = vsyncadd [#allocation6], %s43
      %s45 = sshll.u32 [#allocation7], 4
      %s46 = int_to_ptr.vmem [resolvable:$true] %s45
      %51 = dma.hbm_to_vmem [thread:$0]  %s3, 512, %s46, [#allocation6], 128, 128, 8
    $region17: #{tpu_custom_call.1} parent=1 // pred_fallthru
      _
    // Predicated region
    $region18: #{tpu_custom_call.1} parent=1 // pred_check
      _
    $region19: #{tpu_custom_call.1} parent=1 // pred_check_branch
      %53 = sbr.rel (0) target = $region21
    $region20: #{tpu_custom_call.1} parent=1 // pred_region
      _
    $region21: #{tpu_custom_call.1} parent=1 // pred_fallthru
      _
    // Predicated region
    $region22: #{tpu_custom_call.1} parent=1 // pred_check
      _
    $region23: #{tpu_custom_call.1} parent=1 // pred_check_branch
      %55 = sbr.rel (0) target = $region25
    $region24: #{tpu_custom_call.1} parent=1 // pred_region
      %s57 = ssub.s32 512, 512
      %58 = vsyncadd [#allocation9], %s57
      %s59 = sshll.u32 [#allocation8], 4
      %s60 = int_to_ptr.vmem [resolvable:$true] %s59
      %65 = dma.hbm_to_vmem [thread:$0]  %s5, 512, %s60, [#allocation9], 128, 128, 8
    $region25: #{tpu_custom_call.1} parent=1 // pred_fallthru
      _
    // Predicated region
    $region26: #{tpu_custom_call.1} parent=1 // pred_check
      _
    $region27: #{tpu_custom_call.1} parent=1 // pred_check_branch
      %67 = sbr.rel (0) target = $region29
    $region28: #{tpu_custom_call.1} parent=1 // pred_region
      _
    $region29: #{tpu_custom_call.1} parent=1 // pred_fallthru
      _
    // Predicated region
    $region30: #{tpu_custom_call.1} parent=1 // pred_check
      _
    $region31: #{tpu_custom_call.1} parent=1 // pred_check_branch
      %69 = sbr.rel (0) target = $region33
    $region32: #{tpu_custom_call.1} parent=1 // pred_region
      %70 = dma.done [#allocation3], 128
    $region33: #{tpu_custom_call.1} parent=1 // pred_fallthru
      _
    // Predicated region
    $region34: #{tpu_custom_call.1} parent=1 // pred_check
      _
    $region35: #{tpu_custom_call.1} parent=1 // pred_check_branch
      %72 = sbr.rel (0) target = $region37
    $region36: #{tpu_custom_call.1} parent=1 // pred_region
      %73 = dma.done [#allocation6], 256
    $region37: #{tpu_custom_call.1} parent=1 // pred_fallthru
      _
    // Predicated region
    $region38: #{tpu_custom_call.1} parent=1 // pred_check
      _
    $region39: #{tpu_custom_call.1} parent=1 // pred_check_branch
      %75 = sbr.rel (0) target = $region41
    $region40: #{tpu_custom_call.1} parent=1 // pred_region
      %76 = dma.done [#allocation6], 512
    $region41: #{tpu_custom_call.1} parent=1 // pred_fallthru
      _
    // Predicated region
    $region42: #{tpu_custom_call.1} parent=1 // pred_check
      _
    $region43: #{tpu_custom_call.1} parent=1 // pred_check_branch
      %78 = sbr.rel (0) target = $region45
    $region44: #{tpu_custom_call.1} parent=1 // pred_region
      %79 = dma.done [#allocation9], 512
    $region45: #{tpu_custom_call.1} parent=1 // pred_fallthru
      _
    %v80 = vld [vmem:[#allocation2] sm:$0xff]
    %v81 = vld [vmem:[#allocation5] sm:$0xff]
    %v82 = vld [vmem:[#allocation5 + $0x8] sm:$0xff]
    %v83 = vld [vmem:[%s2] sm:$0x1]
    %v85 = vlaneseq
    %v86 = vshrl.u32 %v85, 7
    %v87 = vsub.s32 0, %v86
    %v88 = vrot.slane %v83, %v87
    %vm90 = vcmask 130048
    %v92 = vsel %vm90, %v80, 0
    %94 = vmatprep.subr.mxu0 0.0
    %95 = vmatpush1.msra.mxu0 %v81
    %96 = vmatprep.subr.mxu0 0.0
    %97 = vmatpush1.msra.mxu0 %v82
    %98 = vmatprep.subr.mxu0 0.0
    %99 = vmatpush1.msra.mxu0 0.0
    %100 = vmatprep.subr.mxu0 0.0
    %101 = vmatpush1.msra.mxu0 0.0
    %102 = vmatprep.subr.mxu0 0.0
    %103 = vmatpush1.msra.mxu0 0.0
    %104 = vmatprep.subr.mxu0 0.0
    %105 = vmatpush1.msra.mxu0 0.0
    %106 = vmatprep.subr.mxu0 0.0
    %107 = vmatpush1.msra.mxu0 0.0
    %108 = vmatprep.subr.mxu0 0.0
    %109 = vmatpush1.msra.mxu0 0.0
    %110 = vmatprep.subr.mxu0 0.0
    %111 = vmatpush1.msra.mxu0 0.0
    %112 = vmatprep.subr.mxu0 0.0
    %113 = vmatpush1.msra.mxu0 0.0
    %114 = vmatprep.subr.mxu0 0.0
    %115 = vmatpush1.msra.mxu0 0.0
    %116 = vmatprep.subr.mxu0 0.0
    %117 = vmatpush1.msra.mxu0 0.0
    %118 = vmatprep.subr.mxu0 0.0
    %119 = vmatpush1.msra.mxu0 0.0
    %120 = vmatprep.subr.mxu0 0.0
    %121 = vmatpush1.msra.mxu0 0.0
    %122 = vmatprep.subr.mxu0 0.0
    %123 = vmatpush1.msra.mxu0 0.0
    %124 = vmatprep.subr.mxu0 0.0
    %125 = vmatpush1.msra.mxu0 0.0
    %126 = vmatprep.subr.mxu0 0.0
    %127 = vmatpush1.msra.mxu0 0.0
    %128 = vmatprep.subr.mxu0 0.0
    %129 = vmatpush1.msra.mxu0 0.0
    %130 = vmatprep.subr.mxu0 0.0
    %131 = vmatpush1.msra.mxu0 0.0
    %132 = vmatprep.subr.mxu0 0.0
    %133 = vmatpush1.msra.mxu0 0.0
    %134 = vmatprep.subr.mxu0 0.0
    %135 = vmatpush1.msra.mxu0 0.0
    %136 = vmatprep.subr.mxu0 0.0
    %137 = vmatpush1.msra.mxu0 0.0
    %138 = vmatprep.subr.mxu0 0.0
    %139 = vmatpush1.msra.mxu0 0.0
    %140 = vmatprep.subr.mxu0 0.0
    %141 = vmatpush1.msra.mxu0 0.0
    %142 = vmatprep.subr.mxu0 0.0
    %143 = vmatpush1.msra.mxu0 0.0
    %144 = vmatprep.subr.mxu0 0.0
    %145 = vmatpush1.msra.mxu0 0.0
    %146 = vmatprep.subr.mxu0 0.0
    %147 = vmatpush1.msra.mxu0 0.0
    %148 = vmatprep.subr.mxu0 0.0
    %149 = vmatpush1.msra.mxu0 0.0
    %150 = vmatprep.subr.mxu0 0.0
    %151 = vmatpush1.msra.mxu0 0.0
    %152 = vmatprep.subr.mxu0 0.0
    %153 = vmatpush1.msra.mxu0 0.0
    %154 = vmatprep.subr.mxu0 0.0
    %155 = vmatpush1.msra.mxu0 0.0
    %156 = vmatprep.subr.mxu0 0.0
    %157 = vmatpush1.msra.mxu0 0.0
    %158 = vmatprep.mubr.f32.mxu0 0.0
    %159 = vmatmul.mubr.f32.gmra.mrb[0].mxu0 %v92
    %v160 = vpop.f32.mrb[0].mxu0
    %v161 = vadd.f32 %v88, %v160
    %v162 = vpop.f32.mrb[0].mxu0
    %163 = vdwg.mxu0
    %v164 = vmul.f32 %v161, 0.01
    %v165 = vmax.f32 %v161, %v164
    %v166 = vld [vmem:[#allocation7] sm:$0xff]
    %v167 = vld [vmem:[#allocation7 + $0x8] sm:$0xff]
    %v168 = vld [vmem:[#allocation7 + $0x10] sm:$0xff]
    %v169 = vld [vmem:[#allocation7 + $0x18] sm:$0xff]
    %v170 = vld [vmem:[%s4] sm:$0x1]
    %v172 = vlaneseq
    %v173 = vshrl.u32 %v172, 7
    %v174 = vsub.s32 0, %v173
    %v175 = vrot.slane %v170, %v174
    %vm177 = vcmask 261120
    %v179 = vsel %vm177, %v165, 0
    %181 = vmatprep.subr.mxu0 0.0
    %182 = vmatpush1.msra.mxu0 %v166
    %183 = vmatprep.subr.mxu0 0.0
    %184 = vmatpush1.msra.mxu0 %v167
    %185 = vmatprep.subr.mxu0 0.0
    %186 = vmatpush1.msra.mxu0 %v168
    %187 = vmatprep.subr.mxu0 0.0
    %188 = vmatpush1.msra.mxu0 %v169
    %189 = vmatprep.subr.mxu0 0.0
    %190 = vmatpush1.msra.mxu0 0.0
    %191 = vmatprep.subr.mxu0 0.0
    %192 = vmatpush1.msra.mxu0 0.0
    %193 = vmatprep.subr.mxu0 0.0
    %194 = vmatpush1.msra.mxu0 0.0
    %195 = vmatprep.subr.mxu0 0.0
    %196 = vmatpush1.msra.mxu0 0.0
    %197 = vmatprep.subr.mxu0 0.0
    %198 = vmatpush1.msra.mxu0 0.0
    %199 = vmatprep.subr.mxu0 0.0
    %200 = vmatpush1.msra.mxu0 0.0
    %201 = vmatprep.subr.mxu0 0.0
    %202 = vmatpush1.msra.mxu0 0.0
    %203 = vmatprep.subr.mxu0 0.0
    %204 = vmatpush1.msra.mxu0 0.0
    %205 = vmatprep.subr.mxu0 0.0
    %206 = vmatpush1.msra.mxu0 0.0
    %207 = vmatprep.subr.mxu0 0.0
    %208 = vmatpush1.msra.mxu0 0.0
    %209 = vmatprep.subr.mxu0 0.0
    %210 = vmatpush1.msra.mxu0 0.0
    %211 = vmatprep.subr.mxu0 0.0
    %212 = vmatpush1.msra.mxu0 0.0
    %213 = vmatprep.subr.mxu0 0.0
    %214 = vmatpush1.msra.mxu0 0.0
    %215 = vmatprep.subr.mxu0 0.0
    %216 = vmatpush1.msra.mxu0 0.0
    %217 = vmatprep.subr.mxu0 0.0
    %218 = vmatpush1.msra.mxu0 0.0
    %219 = vmatprep.subr.mxu0 0.0
    %220 = vmatpush1.msra.mxu0 0.0
    %221 = vmatprep.subr.mxu0 0.0
    %222 = vmatpush1.msra.mxu0 0.0
    %223 = vmatprep.subr.mxu0 0.0
    %224 = vmatpush1.msra.mxu0 0.0
    %225 = vmatprep.subr.mxu0 0.0
    %226 = vmatpush1.msra.mxu0 0.0
    %227 = vmatprep.subr.mxu0 0.0
    %228 = vmatpush1.msra.mxu0 0.0
    %229 = vmatprep.subr.mxu0 0.0
    %230 = vmatpush1.msra.mxu0 0.0
    %231 = vmatprep.subr.mxu0 0.0
    %232 = vmatpush1.msra.mxu0 0.0
    %233 = vmatprep.subr.mxu0 0.0
    %234 = vmatpush1.msra.mxu0 0.0
    %235 = vmatprep.subr.mxu0 0.0
    %236 = vmatpush1.msra.mxu0 0.0
    %237 = vmatprep.subr.mxu0 0.0
    %238 = vmatpush1.msra.mxu0 0.0
    %239 = vmatprep.subr.mxu0 0.0
    %240 = vmatpush1.msra.mxu0 0.0
    %241 = vmatprep.subr.mxu0 0.0
    %242 = vmatpush1.msra.mxu0 0.0
    %243 = vmatprep.subr.mxu0 0.0
    %244 = vmatpush1.msra.mxu0 0.0
    %245 = vmatprep.mubr.f32.mxu0 0.0
    %246 = vmatmul.mubr.f32.gmra.mrb[0].mxu0 %v179
    %v247 = vpop.f32.mrb[0].mxu0
    %v248 = vadd.f32 %v175, %v247
    %v249 = vpop.f32.mrb[0].mxu0
    %250 = vdwg.mxu0
    %v251 = vmul.f32 %v248, 0.01
    %v252 = vmax.f32 %v248, %v251
    %v253 = vld [vmem:[#allocation8] sm:$0xff]
    %v254 = vld [vmem:[#allocation8 + $0x8] sm:$0xff]
    %v255 = vld [vmem:[#allocation8 + $0x10] sm:$0xff]
    %v256 = vld [vmem:[#allocation8 + $0x18] sm:$0xff]
    %v257 = vld [vmem:[%s6] sm:$0x1]
    %v259 = vlaneseq
    %v260 = vshrl.u32 %v259, 7
    %v261 = vsub.s32 0, %v260
    %v262 = vrot.slane %v257, %v261
    %v265 = vsel %vm177, %v252, 0
    %267 = vmatprep.subr.mxu0 0.0
    %268 = vmatpush1.msra.mxu0 %v253
    %269 = vmatprep.subr.mxu0 0.0
    %270 = vmatpush1.msra.mxu0 %v254
    %271 = vmatprep.subr.mxu0 0.0
    %272 = vmatpush1.msra.mxu0 %v255
    %273 = vmatprep.subr.mxu0 0.0
    %274 = vmatpush1.msra.mxu0 %v256
    %275 = vmatprep.subr.mxu0 0.0
    %276 = vmatpush1.msra.mxu0 0.0
    %277 = vmatprep.subr.mxu0 0.0
    %278 = vmatpush1.msra.mxu0 0.0
    %279 = vmatprep.subr.mxu0 0.0
    %280 = vmatpush1.msra.mxu0 0.0
    %281 = vmatprep.subr.mxu0 0.0
    %282 = vmatpush1.msra.mxu0 0.0
    %283 = vmatprep.subr.mxu0 0.0
    %284 = vmatpush1.msra.mxu0 0.0
    %285 = vmatprep.subr.mxu0 0.0
    %286 = vmatpush1.msra.mxu0 0.0
    %287 = vmatprep.subr.mxu0 0.0
    %288 = vmatpush1.msra.mxu0 0.0
    %289 = vmatprep.subr.mxu0 0.0
    %290 = vmatpush1.msra.mxu0 0.0
    %291 = vmatprep.subr.mxu0 0.0
    %292 = vmatpush1.msra.mxu0 0.0
    %293 = vmatprep.subr.mxu0 0.0
    %294 = vmatpush1.msra.mxu0 0.0
    %295 = vmatprep.subr.mxu0 0.0
    %296 = vmatpush1.msra.mxu0 0.0
    %297 = vmatprep.subr.mxu0 0.0
    %298 = vmatpush1.msra.mxu0 0.0
    %299 = vmatprep.subr.mxu0 0.0
    %300 = vmatpush1.msra.mxu0 0.0
    %301 = vmatprep.subr.mxu0 0.0
    %302 = vmatpush1.msra.mxu0 0.0
    %303 = vmatprep.subr.mxu0 0.0
    %304 = vmatpush1.msra.mxu0 0.0
    %305 = vmatprep.subr.mxu0 0.0
    %306 = vmatpush1.msra.mxu0 0.0
    %307 = vmatprep.subr.mxu0 0.0
    %308 = vmatpush1.msra.mxu0 0.0
    %309 = vmatprep.subr.mxu0 0.0
    %310 = vmatpush1.msra.mxu0 0.0
    %311 = vmatprep.subr.mxu0 0.0
    %312 = vmatpush1.msra.mxu0 0.0
    %313 = vmatprep.subr.mxu0 0.0
    %314 = vmatpush1.msra.mxu0 0.0
    %315 = vmatprep.subr.mxu0 0.0
    %316 = vmatpush1.msra.mxu0 0.0
    %317 = vmatprep.subr.mxu0 0.0
    %318 = vmatpush1.msra.mxu0 0.0
    %319 = vmatprep.subr.mxu0 0.0
    %320 = vmatpush1.msra.mxu0 0.0
    %321 = vmatprep.subr.mxu0 0.0
    %322 = vmatpush1.msra.mxu0 0.0
    %323 = vmatprep.subr.mxu0 0.0
    %324 = vmatpush1.msra.mxu0 0.0
    %325 = vmatprep.subr.mxu0 0.0
    %326 = vmatpush1.msra.mxu0 0.0
    %327 = vmatprep.subr.mxu0 0.0
    %328 = vmatpush1.msra.mxu0 0.0
    %329 = vmatprep.subr.mxu0 0.0
    %330 = vmatpush1.msra.mxu0 0.0
    %331 = vmatprep.mubr.f32.mxu0 0.0
    %332 = vmatmul.mubr.f32.gmra.mrb[0].mxu0 %v265
    %v333 = vpop.f32.mrb[0].mxu0
    %v334 = vadd.f32 %v262, %v333
    %v335 = vpop.f32.mrb[0].mxu0
    %336 = vdwg.mxu0
    %v337 = vtanh.pop %v334
    %338 = vst [vmem:[#allocation10] sm:$0xff] %v337
    // Predicated region
    $region46: #{tpu_custom_call.1} parent=1 // pred_check
      _
    $region47: #{tpu_custom_call.1} parent=1 // pred_check_branch
      %340 = sbr.rel (0) target = $region49
    $region48: #{tpu_custom_call.1} parent=1 // pred_region
      %s342 = ssub.s32 128, 128
      %343 = vsyncadd [#allocation4], %s342
      %s345 = sshll.u32 [#allocation10], 4
      %s346 = int_to_ptr.vmem [resolvable:$true] %s345
      %348 = dma.vmem_to_hbm [thread:$0]  %s346, 128, %s7, [#allocation4]
    $region49: #{tpu_custom_call.1} parent=1 // pred_fallthru
      _
    // Predicated region
    $region50: #{tpu_custom_call.1} parent=1 // pred_check
      _
    $region51: #{tpu_custom_call.1} parent=1 // pred_check_branch
      %350 = sbr.rel (0) target = $region53
    $region52: #{tpu_custom_call.1} parent=1 // pred_region
      %351 = dma.done [#allocation4], 128
    $region53: #{tpu_custom_call.1} parent=1 // pred_fallthru
      _
    %352 = vsyncpa [#allocation3], 1
    %353 = vsyncpa [#allocation6], 1
    %354 = vsyncpa [#allocation9], 1
    %355 = vsyncpa [#allocation4], 1

</llo_original>
